<compile_context>
chip_gen: v7x
topology: tpu7x:2x2x1
jax: 0.10.0
libtpu: 0.0.40
codegen_flags: <defaults>
</compile_context>

<pallas_src>
import functools

import jax
import jax.numpy as jnp
from jax.experimental import pallas as pl
from jax.experimental.pallas import tpu as pltpu


def _conv3x3_banded_kernel(x_ref, w_ref, b_ref, o_ref, *, B, H, W, Cin, Cout):
    """3x3 conv (stride=1, padding=1) as 3 banded MXU dots with N = W*Cout.

    x_ref : (B, H+2, W*Cin)    H-zero-padded, lane-dense rows      (VMEM)
    w_ref : (3, W*Cin, W*Cout) banded weights, one per dy          (VMEM)
    b_ref : (1, W*Cout)        bias pre-tiled into output layout   (VMEM)
    o_ref : (B*H, W*Cout)      lane-dense output rows              (VMEM)
    """
    x_pad = x_ref[...]                                    # (B, H+2, W*Cin)

    acc = jnp.zeros((B * H, W * Cout), jnp.float32)
    for dy in range(3):                                   # static unroll: 3 dots
        # Sublane slice only (no lane-axis concat); feeds the MXU directly.
        lhs = x_pad[:, dy:dy + H, :].reshape(B * H, W * Cin)
        acc = acc + jnp.dot(lhs, w_ref[dy],
                            preferred_element_type=jnp.float32)

    # Result is already in the store layout; single bias add, lane-dense store
    # (unmasked vst when W*Cout is a multiple of 128, as it is here).
    o_ref[...] = (acc + b_ref[...]).astype(o_ref.dtype)


def _banded_weights(weight, W):
    """(Cout, Cin, 3, 3) OIHW -> (3, W*Cin, W*Cout) banded matrices.

    band[dy][w_in*Cin + cin, w_out*Cout + cout] =
        weight[cout, cin, dy, w_in - w_out + 1]   if |w_in - w_out| <= 1 else 0
    The zero entries for out-of-range dx encode the W-direction padding=1.
    """
    Cout, Cin, _, _ = weight.shape
    w_hwio = jnp.transpose(weight, (2, 3, 1, 0))          # (dy, dx, cin, cout)
    w_out = jnp.arange(W)[:, None, None]                  # (W, 1, 1)
    dx = jnp.arange(3)[None, :, None]                     # (1, 3, 1)
    w_in = jnp.arange(W)[None, None, :]                   # (1, 1, W)
    sel = (w_in == w_out + dx - 1).astype(weight.dtype)   # (W, 3, W)
    band = jnp.einsum("odi,ydcu->yicou", sel, w_hwio)     # (3, W, Cin, W, Cout)
    return band.reshape(3, W * Cin, W * Cout)


@jax.jit
def unet_forward(x_nchw, weight, bias):
    """Equivalent of UNet.forward: nn.Conv2d(Cin, Cout, kernel_size=3, padding=1).

    x_nchw : (B, Cin, H, W)    float32
    weight : (Cout, Cin, 3, 3) float32  (PyTorch OIHW layout)
    bias   : (Cout,)           float32
    returns: (B, Cout, H, W)   float32
    """
    B, Cin, H, W = x_nchw.shape
    Cout = weight.shape[0]

    # Layout glue: NCHW -> lane-dense rows (B, H, W*Cin), plus the 1-row H halo.
    # TODO(synk): at real UNet sizes keep the network NHWC end-to-end so these
    # wrapper transposes / reshapes (full HBM round trips) disappear.
    x_rows = jnp.transpose(x_nchw, (0, 2, 3, 1)).reshape(B, H, W * Cin)
    x_pad = jnp.pad(x_rows, ((0, 0), (1, 1), (0, 0)))     # (B, H+2, W*Cin)

    w_band = _banded_weights(weight, W)                   # (3, W*Cin, W*Cout)
    bias_row = jnp.tile(bias, W).reshape(1, W * Cout)     # output-layout bias

    kernel = functools.partial(
        _conv3x3_banded_kernel, B=B, H=H, W=W, Cin=Cin, Cout=Cout
    )

    out_rows = pl.pallas_call(
        kernel,
        out_shape=jax.ShapeDtypeStruct((B * H, W * Cout), x_nchw.dtype),
        in_specs=[
            pl.BlockSpec(memory_space=pltpu.MemorySpace.VMEM),
            pl.BlockSpec(memory_space=pltpu.MemorySpace.VMEM),
            pl.BlockSpec(memory_space=pltpu.MemorySpace.VMEM),
        ],
        out_specs=pl.BlockSpec(memory_space=pltpu.MemorySpace.VMEM),
    )(x_pad, w_band, bias_row)

    out_nhwc = out_rows.reshape(B, H, W, Cout)
    return jnp.transpose(out_nhwc, (0, 3, 1, 2))          # (B, Cout, H, W)


if __name__ == "__main__":
    # Small shapes consistent with the module's forward.
    B, Cin, Cout, H, W = 2, 4, 8, 16, 16

    key = jax.random.PRNGKey(0)
    kx, kw, kb = jax.random.split(key, 3)
    x = jax.random.normal(kx, (B, Cin, H, W), dtype=jnp.float32)
    weight = jax.random.normal(kw, (Cout, Cin, 3, 3), dtype=jnp.float32) * 0.1
    bias = jax.random.normal(kb, (Cout,), dtype=jnp.float32) * 0.1

    out = jax.block_until_ready(unet_forward(x, weight, bias))

    # Reference: XLA conv with identical semantics to PyTorch NCHW conv.
    ref = jax.lax.conv_general_dilated(
        x, weight, window_strides=(1, 1), padding=((1, 1), (1, 1)),
        dimension_numbers=("NCHW", "OIHW", "NCHW"),
    ) + bias.reshape(1, Cout, 1, 1)
    ref = jax.block_until_ready(ref)

    assert out.shape == (B, Cout, H, W)
    assert jnp.allclose(out, ref, atol=1e-4, rtol=1e-4)
    print("KERNEL_OK")
</pallas_src>

<mosaic_0001>
module attributes {stable_mosaic.version = 11 : i64} {
  func.func @_conv3x3_banded_kernel(%arg0: memref<2x18x64xf32, #tpu.memory_space<vmem>>, %arg1: memref<3x64x128xf32, #tpu.memory_space<vmem>>, %arg2: memref<1x128xf32, #tpu.memory_space<vmem>>, %arg3: memref<32x128xf32, #tpu.memory_space<vmem>>) attributes {dimension_semantics = [], scalar_prefetch = 0 : i64, scratch_operands = 0 : i64, tpu.core_type = #tpu.core_type<tc>} {
    %c0 = arith.constant 0 : index
    %c0_0 = arith.constant 0 : index
    %c0_1 = arith.constant 0 : index
    %0 = vector.load %arg0[%c0, %c0_0, %c0_1] : memref<2x18x64xf32, #tpu.memory_space<vmem>>, vector<2x18x64xf32>
    %cst = arith.constant 0.000000e+00 : f32
    %1 = vector.broadcast %cst : f32 to vector<32x128xf32>
    %2 = vector.extract_strided_slice %0 {offsets = [0, 0, 0], sizes = [2, 16, 64], strides = [1, 1, 1]} : vector<2x18x64xf32> to vector<2x16x64xf32>
    %3 = vector.shape_cast %2 : vector<2x16x64xf32> to vector<32x64xf32>
    %c0_2 = arith.constant 0 : index
    %c0_3 = arith.constant 0 : index
    %c0_4 = arith.constant 0 : index
    %4 = vector.load %arg1[%c0_2, %c0_3, %c0_4] : memref<3x64x128xf32, #tpu.memory_space<vmem>>, vector<1x64x128xf32>
    %5 = vector.shape_cast %4 : vector<1x64x128xf32> to vector<64x128xf32>
    %cst_5 = arith.constant dense<0.000000e+00> : vector<32x128xf32>
    %6 = tpu.matmul %3, %5, %cst_5 {dimension_numbers = #tpu.dot_dimension_numbers<[1], [0], [0], [1], [0, 0, 1, 1], [], []>} : vector<32x64xf32>, vector<64x128xf32>, vector<32x128xf32> -> vector<32x128xf32>
    %7 = arith.addf %1, %6 : vector<32x128xf32>
    %8 = vector.extract_strided_slice %0 {offsets = [0, 1, 0], sizes = [2, 16, 64], strides = [1, 1, 1]} : vector<2x18x64xf32> to vector<2x16x64xf32>
    %9 = vector.shape_cast %8 : vector<2x16x64xf32> to vector<32x64xf32>
    %c1 = arith.constant 1 : index
    %c0_6 = arith.constant 0 : index
    %c0_7 = arith.constant 0 : index
    %10 = vector.load %arg1[%c1, %c0_6, %c0_7] : memref<3x64x128xf32, #tpu.memory_space<vmem>>, vector<1x64x128xf32>
    %11 = vector.shape_cast %10 : vector<1x64x128xf32> to vector<64x128xf32>
    %cst_8 = arith.constant dense<0.000000e+00> : vector<32x128xf32>
    %12 = tpu.matmul %9, %11, %cst_8 {dimension_numbers = #tpu.dot_dimension_numbers<[1], [0], [0], [1], [0, 0, 1, 1], [], []>} : vector<32x64xf32>, vector<64x128xf32>, vector<32x128xf32> -> vector<32x128xf32>
    %13 = arith.addf %7, %12 : vector<32x128xf32>
    %14 = vector.extract_strided_slice %0 {offsets = [0, 2, 0], sizes = [2, 16, 64], strides = [1, 1, 1]} : vector<2x18x64xf32> to vector<2x16x64xf32>
    %15 = vector.shape_cast %14 : vector<2x16x64xf32> to vector<32x64xf32>
    %c2 = arith.constant 2 : index
    %c0_9 = arith.constant 0 : index
    %c0_10 = arith.constant 0 : index
    %16 = vector.load %arg1[%c2, %c0_9, %c0_10] : memref<3x64x128xf32, #tpu.memory_space<vmem>>, vector<1x64x128xf32>
    %17 = vector.shape_cast %16 : vector<1x64x128xf32> to vector<64x128xf32>
    %cst_11 = arith.constant dense<0.000000e+00> : vector<32x128xf32>
    %18 = tpu.matmul %15, %17, %cst_11 {dimension_numbers = #tpu.dot_dimension_numbers<[1], [0], [0], [1], [0, 0, 1, 1], [], []>} : vector<32x64xf32>, vector<64x128xf32>, vector<32x128xf32> -> vector<32x128xf32>
    %19 = arith.addf %13, %18 : vector<32x128xf32>
    %c0_12 = arith.constant 0 : index
    %c0_13 = arith.constant 0 : index
    %20 = vector.load %arg2[%c0_12, %c0_13] : memref<1x128xf32, #tpu.memory_space<vmem>>, vector<1x128xf32>
    %21 = vector.broadcast %20 : vector<1x128xf32> to vector<32x128xf32>
    %22 = arith.addf %19, %21 : vector<32x128xf32>
    %c0_14 = arith.constant 0 : index
    %c0_15 = arith.constant 0 : index
    %23 = vector.load %arg3[%c0_14, %c0_15] : memref<32x128xf32, #tpu.memory_space<vmem>>, vector<32x128xf32>
    tpu.vector_store %arg3[%c0_14, %c0_15], %22 {strides = array<i32>} : memref<32x128xf32, #tpu.memory_space<vmem>>, vector<32x128xf32>,
    return
  }
}

</mosaic_0001>

<llo_original>
// kernel: tile.8
$region0: #{tile.8}
  #allocation0 [shape = 's32[1]{0}', space=sflag, size = 0x4, scoped, tag = 'scoped memory for tile.8']
  %s0 = inlined_call_operand.vmem [shape: f32[8], index: 0, kind: input, shape index: {}]
  %s1 = inlined_call_operand.vmem [shape: f32[16,8], index: 1, kind: output, shape index: {}]
  // Predicated region
  $region2: #{tile.8} parent=0 // pred_check
    _
  $region3: #{tile.8} parent=0 // pred_check_branch
    %3 = sbr.rel (0) target = $region5
  $region4: #{tile.8} parent=0 // pred_region
    _
  $region5: #{tile.8} parent=0 // pred_fallthru
    _
  %v4 = vld [vmem:[%s0] ss:$0 sm:$0xff]
  %5 = vst [vmem:[%s1] sm:$0xff] %v4
  %s6 = scalar_lea.vmem %s1, 8
  %7 = vst [vmem:[%s6] sm:$0xff] %v4

// kernel: tile.9
$region0: #{tile.9}
  %s0 = inlined_call_operand.vmem [shape: f32[16,8], index: 0, kind: input, shape index: {}]
  %s1 = inlined_call_operand.vmem [shape: f32[1,128], index: 1, kind: output, shape index: {}]
  $region1: #{tile.9} parent=0
    #allocation0 [shape = 'u8[4096]{0}', space=vmem, size = 0x1000, scoped, tag = 'scoped mem for output reshape']
    %v2 = vld [vmem:[%s0] sm:$0x1]
    %vm3 = vcmask 64512
    %4 = vst.msk [vmem:[#allocation0] sm:$0x1] %vm3, %v2
    %s5 = scalar_lea.vmem %s0, 15
    %v6 = vld [vmem:[%s5] sm:$0x1]
    %7 = vrot.lane.b32.xlu0 %v6, 120
    %v8 = vpop.permute.xlu0 %7
    %vm9 = vcmask 1048512
    %10 = vst.msk [vmem:[#allocation0] sm:$0x1] %vm9, %v8
    %s11 = scalar_lea.vmem %s0, 14
    %v12 = vld [vmem:[%s11] sm:$0x1]
    %13 = vrot.lane.b32.xlu0 %v12, 112
    %v14 = vpop.permute.xlu0 %13
    %vm15 = vcmask 982912
    %16 = vst.msk [vmem:[#allocation0] sm:$0x1] %vm15, %v14
    %s17 = scalar_lea.vmem %s0, 13
    %v18 = vld [vmem:[%s17] sm:$0x1]
    %19 = vrot.lane.b32.xlu0 %v18, 104
    %v20 = vpop.permute.xlu0 %19
    %vm21 = vcmask 917312
    %22 = vst.msk [vmem:[#allocation0] sm:$0x1] %vm21, %v20
    %s23 = scalar_lea.vmem %s0, 12
    %v24 = vld [vmem:[%s23] sm:$0x1]
    %25 = vrot.lane.b32.xlu0 %v24, 96
    %v26 = vpop.permute.xlu0 %25
    %vm27 = vcmask 851712
    %28 = vst.msk [vmem:[#allocation0] sm:$0x1] %vm27, %v26
    %s29 = scalar_lea.vmem %s0, 11
    %v30 = vld [vmem:[%s29] sm:$0x1]
    %31 = vrot.lane.b32.xlu0 %v30, 88
    %v32 = vpop.permute.xlu0 %31
    %vm33 = vcmask 786112
    %34 = vst.msk [vmem:[#allocation0] sm:$0x1] %vm33, %v32
    %s35 = scalar_lea.vmem %s0, 10
    %v36 = vld [vmem:[%s35] sm:$0x1]
    %37 = vrot.lane.b32.xlu0 %v36, 80
    %v38 = vpop.permute.xlu0 %37
    %vm39 = vcmask 720512
    %40 = vst.msk [vmem:[#allocation0] sm:$0x1] %vm39, %v38
    %s41 = scalar_lea.vmem %s0, 9
    %v42 = vld [vmem:[%s41] sm:$0x1]
    %43 = vrot.lane.b32.xlu0 %v42, 72
    %v44 = vpop.permute.xlu0 %43
    %vm45 = vcmask 654912
    %46 = vst.msk [vmem:[#allocation0] sm:$0x1] %vm45, %v44
    %s47 = scalar_lea.vmem %s0, 8
    %v48 = vld [vmem:[%s47] sm:$0x1]
    %49 = vrot.lane.b32.xlu0 %v48, 64
    %v50 = vpop.permute.xlu0 %49
    %vm51 = vcmask 589312
    %52 = vst.msk [vmem:[#allocation0] sm:$0x1] %vm51, %v50
    %s53 = scalar_lea.vmem %s0, 7
    %v54 = vld [vmem:[%s53] sm:$0x1]
    %55 = vrot.lane.b32.xlu0 %v54, 56
    %v56 = vpop.permute.xlu0 %55
    %vm57 = vcmask 523712
    %58 = vst.msk [vmem:[#allocation0] sm:$0x1] %vm57, %v56
    %s59 = scalar_lea.vmem %s0, 6
    %v60 = vld [vmem:[%s59] sm:$0x1]
    %61 = vrot.lane.b32.xlu0 %v60, 48
    %v62 = vpop.permute.xlu0 %61
    %vm63 = vcmask 458112
    %64 = vst.msk [vmem:[#allocation0] sm:$0x1] %vm63, %v62
    %s65 = scalar_lea.vmem %s0, 5
    %v66 = vld [vmem:[%s65] sm:$0x1]
    %67 = vrot.lane.b32.xlu0 %v66, 40
    %v68 = vpop.permute.xlu0 %67
    %vm69 = vcmask 392512
    %70 = vst.msk [vmem:[#allocation0] sm:$0x1] %vm69, %v68
    %s71 = scalar_lea.vmem %s0, 4
    %v72 = vld [vmem:[%s71] sm:$0x1]
    %73 = vrot.lane.b32.xlu0 %v72, 32
    %v74 = vpop.permute.xlu0 %73
    %vm75 = vcmask 326912
    %76 = vst.msk [vmem:[#allocation0] sm:$0x1] %vm75, %v74
    %s77 = scalar_lea.vmem %s0, 3
    %v78 = vld [vmem:[%s77] sm:$0x1]
    %79 = vrot.lane.b32.xlu0 %v78, 24
    %v80 = vpop.permute.xlu0 %79
    %vm81 = vcmask 261312
    %82 = vst.msk [vmem:[#allocation0] sm:$0x1] %vm81, %v80
    %s83 = scalar_lea.vmem %s0, 2
    %v84 = vld [vmem:[%s83] sm:$0x1]
    %85 = vrot.lane.b32.xlu0 %v84, 16
    %v86 = vpop.permute.xlu0 %85
    %vm87 = vcmask 195712
    %88 = vst.msk [vmem:[#allocation0] sm:$0x1] %vm87, %v86
    %s89 = scalar_lea.vmem %s0, 1
    %v90 = vld [vmem:[%s89] sm:$0x1]
    %91 = vrot.lane.b32.xlu0 %v90, 8
    %v92 = vpop.permute.xlu0 %91
    %vm93 = vcmask 130112
    %94 = vst.msk [vmem:[#allocation0] sm:$0x1] %vm93, %v92
    %s96 = sshllo.u32 0, 1
    %v98 = vld [vmem:[#allocation0] sm:%s96]
    %s99 = sshllo.u32 0, 1
    %100 = vst [vmem:[%s1] sm:%s99] %v98

// kernel: unet_forward.1
$region0: #{unet_forward.1}
  #allocation0 [shape = 'u32[]', space=smem, size = 0x4, offset = 0x4, fixed_abs, tag = 'smem constant byte address 0x4 - core index']
  #allocation1 [shape = 'u32[144,128]{1,0:T(1,128)}', space=vmem, size = 0x12000, scoped, tag = 'internal scratch']
  %s0 = inlined_call_operand.vmem [shape: f32[2,18,64], index: 0, kind: input, shape index: {}]
  %s1 = inlined_call_operand.vmem [shape: f32[3,64,128], index: 1, kind: input, shape index: {}]
  %s2 = inlined_call_operand.vmem [shape: f32[1,128], index: 2, kind: input, shape index: {}]
  %s3 = inlined_call_operand.vmem [shape: f32[32,128], index: 3, kind: output, shape index: {}]
  %s4 = sld [smem:[#allocation0]]
  $region22: #{unet_forward.1} parent=0
    _
  %s6 = ssub.s32 1, %s4
  %s7 = scalar_select 0, %s6, %s4
  // Predicated region
  $region2: #{unet_forward.1} parent=0 // pred_check
    _
  $region3: #{unet_forward.1} parent=0 // pred_check_branch
    %9 = sbr.rel (0) target = $region5
  $region4: #{unet_forward.1} parent=0 // pred_region
    _
  $region5: #{unet_forward.1} parent=0 // pred_fallthru
    _
  // Predicated region
  $region6: #{unet_forward.1} parent=0 // pred_check
    _
  $region7: #{unet_forward.1} parent=0 // pred_check_branch
    %11 = sbr.rel (0) target = $region9
  $region8: #{unet_forward.1} parent=0 // pred_region
    _
  $region9: #{unet_forward.1} parent=0 // pred_fallthru
    _
  // Predicated region
  $region10: #{unet_forward.1} parent=0 // pred_check
    _
  $region11: #{unet_forward.1} parent=0 // pred_check_branch
    %13 = sbr.rel (0) target = $region13
  $region12: #{unet_forward.1} parent=0 // pred_region
    _
  $region13: #{unet_forward.1} parent=0 // pred_fallthru
    _
  %v14 = vld [vmem:[%s0] sm:$0xff]
  %v15 = vld [vmem:[%s0 + $0x8] sm:$0xff]
  %v16 = vld [vmem:[%s0 + $0x10] sm:$0x3]
  %v17 = vld [vmem:[%s0 + $0x18] sm:$0xff]
  %v18 = vld [vmem:[%s0 + $0x20] sm:$0xff]
  %v19 = vld [vmem:[%s0 + $0x28] sm:$0x3]
  %v20 = vld [vmem:[%s1] sm:$0xff]
  %v21 = vld [vmem:[%s1 + $0x8] sm:$0xff]
  %v22 = vld [vmem:[%s1 + $0x10] sm:$0xff]
  %v23 = vld [vmem:[%s1 + $0x18] sm:$0xff]
  %v24 = vld [vmem:[%s1 + $0x20] sm:$0xff]
  %v25 = vld [vmem:[%s1 + $0x28] sm:$0xff]
  %v26 = vld [vmem:[%s1 + $0x30] sm:$0xff]
  %v27 = vld [vmem:[%s1 + $0x38] sm:$0xff]
  %vm34 = vcmask 1046528
  %v35 = vrot.slane %v14, 1
  %v36 = vrot.slane %v15, 1
  %v37 = vsel %vm34, %v35, %v36
  %v38 = vrot.slane %v16, 1
  %v39 = vsel %vm34, %v36, %v38
  %v40 = vrot.slane %v17, 1
  %v41 = vrot.slane %v18, 1
  %v42 = vsel %vm34, %v40, %v41
  %v43 = vrot.slane %v19, 1
  %v44 = vsel %vm34, %v41, %v43
  %s45 = scalar_lea.vmem %s1, 64
  %v46 = vld [vmem:[%s45] sm:$0xff]
  %v47 = vld [vmem:[%s45 + $0x8] sm:$0xff]
  %v48 = vld [vmem:[%s45 + $0x10] sm:$0xff]
  %v49 = vld [vmem:[%s45 + $0x18] sm:$0xff]
  %v50 = vld [vmem:[%s45 + $0x20] sm:$0xff]
  %v51 = vld [vmem:[%s45 + $0x28] sm:$0xff]
  %v52 = vld [vmem:[%s45 + $0x30] sm:$0xff]
  %v53 = vld [vmem:[%s45 + $0x38] sm:$0xff]
  %vm54 = vcmask 523264
  %v55 = vsel %vm54, %v37, 0
  %v57 = vsel %vm54, %v39, 0
  %v59 = vsel %vm54, %v42, 0
  %v61 = vsel %vm54, %v44, 0
  %63 = vmatprep.subr.mxu0 0.0
  %64 = vmatpush1.msra.mxu0 %v46
  %65 = vmatprep.subr.mxu0 0.0
  %66 = vmatpush1.msra.mxu0 %v47
  %67 = vmatprep.subr.mxu0 0.0
  %68 = vmatpush1.msra.mxu0 %v48
  %69 = vmatprep.subr.mxu0 0.0
  %70 = vmatpush1.msra.mxu0 %v49
  %71 = vmatprep.subr.mxu0 0.0
  %72 = vmatpush1.msra.mxu0 %v50
  %73 = vmatprep.subr.mxu0 0.0
  %74 = vmatpush1.msra.mxu0 %v51
  %75 = vmatprep.subr.mxu0 0.0
  %76 = vmatpush1.msra.mxu0 %v52
  %77 = vmatprep.subr.mxu0 0.0
  %78 = vmatpush1.msra.mxu0 %v53
  %79 = vmatprep.subr.mxu0 0.0
  %80 = vmatpush1.msra.mxu0 0.0
  %81 = vmatprep.subr.mxu0 0.0
  %82 = vmatpush1.msra.mxu0 0.0
  %83 = vmatprep.subr.mxu0 0.0
  %84 = vmatpush1.msra.mxu0 0.0
  %85 = vmatprep.subr.mxu0 0.0
  %86 = vmatpush1.msra.mxu0 0.0
  %87 = vmatprep.subr.mxu0 0.0
  %88 = vmatpush1.msra.mxu0 0.0
  %89 = vmatprep.subr.mxu0 0.0
  %90 = vmatpush1.msra.mxu0 0.0
  %91 = vmatprep.subr.mxu0 0.0
  %92 = vmatpush1.msra.mxu0 0.0
  %93 = vmatprep.subr.mxu0 0.0
  %94 = vmatpush1.msra.mxu0 0.0
  %95 = vmatprep.subr.mxu0 0.0
  %96 = vmatpush1.msra.mxu0 0.0
  %97 = vmatprep.subr.mxu0 0.0
  %98 = vmatpush1.msra.mxu0 0.0
  %99 = vmatprep.subr.mxu0 0.0
  %100 = vmatpush1.msra.mxu0 0.0
  %101 = vmatprep.subr.mxu0 0.0
  %102 = vmatpush1.msra.mxu0 0.0
  %103 = vmatprep.subr.mxu0 0.0
  %104 = vmatpush1.msra.mxu0 0.0
  %105 = vmatprep.subr.mxu0 0.0
  %106 = vmatpush1.msra.mxu0 0.0
  %107 = vmatprep.subr.mxu0 0.0
  %108 = vmatpush1.msra.mxu0 0.0
  %109 = vmatprep.subr.mxu0 0.0
  %110 = vmatpush1.msra.mxu0 0.0
  %111 = vmatprep.subr.mxu0 0.0
  %112 = vmatpush1.msra.mxu0 0.0
  %113 = vmatprep.subr.mxu0 0.0
  %114 = vmatpush1.msra.mxu0 0.0
  %115 = vmatprep.subr.mxu0 0.0
  %116 = vmatpush1.msra.mxu0 0.0
  %117 = vmatprep.subr.mxu0 0.0
  %118 = vmatpush1.msra.mxu0 0.0
  %119 = vmatprep.subr.mxu0 0.0
  %120 = vmatpush1.msra.mxu0 0.0
  %121 = vmatprep.subr.mxu0 0.0
  %122 = vmatpush1.msra.mxu0 0.0
  %123 = vmatprep.subr.mxu0 0.0
  %124 = vmatpush1.msra.mxu0 0.0
  %125 = vmatprep.subr.mxu0 0.0
  %126 = vmatpush1.msra.mxu0 0.0
  %127 = vmatprep.mubr.f32.mxu0 0.0
  %128 = vmatmul.mubr.f32.gmra.mrb[0].mxu0 %v55
  %v129 = vpop.f32.mrb[0].mxu0
  %v130 = vadd.f32 0.0, %v129
  %v131 = vpop.f32.mrb[0].mxu0
  %132 = vmatprep.mubr.f32.mxu0 0.0
  %133 = vmatmul.mubr.f32.gmra.mrb[0].mxu0 %v57
  %v134 = vpop.f32.mrb[0].mxu0
  %v135 = vadd.f32 0.0, %v134
  %v136 = vpop.f32.mrb[0].mxu0
  %137 = vmatprep.mubr.f32.mxu0 0.0
  %138 = vmatmul.mubr.f32.gmra.mrb[0].mxu0 %v59
  %v139 = vpop.f32.mrb[0].mxu0
  %v140 = vadd.f32 0.0, %v139
  %v141 = vpop.f32.mrb[0].mxu0
  %142 = vmatprep.mubr.f32.mxu0 0.0
  %143 = vmatmul.mubr.f32.gmra.mrb[0].mxu0 %v61
  %v144 = vpop.f32.mrb[0].mxu0
  %v145 = vadd.f32 0.0, %v144
  %v146 = vpop.f32.mrb[0].mxu0
  %147 = vdwg.mxu0
  %v148 = vsel %vm54, %v14, 0
  %v150 = vsel %vm54, %v15, 0
  %v152 = vsel %vm54, %v17, 0
  %v154 = vsel %vm54, %v18, 0
  %156 = vmatprep.subr.mxu0 0.0
  %157 = vmatpush1.msra.mxu0 %v20
  %158 = vmatprep.subr.mxu0 0.0
  %159 = vmatpush1.msra.mxu0 %v21
  %160 = vmatprep.subr.mxu0 0.0
  %161 = vmatpush1.msra.mxu0 %v22
  %162 = vmatprep.subr.mxu0 0.0
  %163 = vmatpush1.msra.mxu0 %v23
  %164 = vmatprep.subr.mxu0 0.0
  %165 = vmatpush1.msra.mxu0 %v24
  %166 = vmatprep.subr.mxu0 0.0
  %167 = vmatpush1.msra.mxu0 %v25
  %168 = vmatprep.subr.mxu0 0.0
  %169 = vmatpush1.msra.mxu0 %v26
  %170 = vmatprep.subr.mxu0 0.0
  %171 = vmatpush1.msra.mxu0 %v27
  %172 = vmatprep.subr.mxu0 0.0
  %173 = vmatpush1.msra.mxu0 0.0
  %174 = vmatprep.subr.mxu0 0.0
  %175 = vmatpush1.msra.mxu0 0.0
  %176 = vmatprep.subr.mxu0 0.0
  %177 = vmatpush1.msra.mxu0 0.0
  %178 = vmatprep.subr.mxu0 0.0
  %179 = vmatpush1.msra.mxu0 0.0
  %180 = vmatprep.subr.mxu0 0.0
  %181 = vmatpush1.msra.mxu0 0.0
  %182 = vmatprep.subr.mxu0 0.0
  %183 = vmatpush1.msra.mxu0 0.0
  %184 = vmatprep.subr.mxu0 0.0
  %185 = vmatpush1.msra.mxu0 0.0
  %186 = vmatprep.subr.mxu0 0.0
  %187 = vmatpush1.msra.mxu0 0.0
  %188 = vmatprep.subr.mxu0 0.0
  %189 = vmatpush1.msra.mxu0 0.0
  %190 = vmatprep.subr.mxu0 0.0
  %191 = vmatpush1.msra.mxu0 0.0
  %192 = vmatprep.subr.mxu0 0.0
  %193 = vmatpush1.msra.mxu0 0.0
  %194 = vmatprep.subr.mxu0 0.0
  %195 = vmatpush1.msra.mxu0 0.0
  %196 = vmatprep.subr.mxu0 0.0
  %197 = vmatpush1.msra.mxu0 0.0
  %198 = vmatprep.subr.mxu0 0.0
  %199 = vmatpush1.msra.mxu0 0.0
  %200 = vmatprep.subr.mxu0 0.0
  %201 = vmatpush1.msra.mxu0 0.0
  %202 = vmatprep.subr.mxu0 0.0
  %203 = vmatpush1.msra.mxu0 0.0
  %204 = vmatprep.subr.mxu0 0.0
  %205 = vmatpush1.msra.mxu0 0.0
  %206 = vmatprep.subr.mxu0 0.0
  %207 = vmatpush1.msra.mxu0 0.0
  %208 = vmatprep.subr.mxu0 0.0
  %209 = vmatpush1.msra.mxu0 0.0
  %210 = vmatprep.subr.mxu0 0.0
  %211 = vmatpush1.msra.mxu0 0.0
  %212 = vmatprep.subr.mxu0 0.0
  %213 = vmatpush1.msra.mxu0 0.0
  %214 = vmatprep.subr.mxu0 0.0
  %215 = vmatpush1.msra.mxu0 0.0
  %216 = vmatprep.subr.mxu0 0.0
  %217 = vmatpush1.msra.mxu0 0.0
  %218 = vmatprep.subr.mxu0 0.0
  %219 = vmatpush1.msra.mxu0 0.0
  %220 = vmatprep.mubr.f32.mxu0 0.0
  %221 = vmatmul.mubr.f32.gmra.mrb[0].mxu0 %v148
  %v222 = vpop.f32.mrb[0].mxu0
  %v223 = vadd.f32 %v130, %v222
  %v224 = vpop.f32.mrb[0].mxu0
  %225 = vmatprep.mubr.f32.mxu0 0.0
  %226 = vmatmul.mubr.f32.gmra.mrb[0].mxu0 %v150
  %v227 = vpop.f32.mrb[0].mxu0
  %v228 = vadd.f32 %v135, %v227
  %v229 = vpop.f32.mrb[0].mxu0
  %230 = vmatprep.mubr.f32.mxu0 0.0
  %231 = vmatmul.mubr.f32.gmra.mrb[0].mxu0 %v152
  %v232 = vpop.f32.mrb[0].mxu0
  %v233 = vadd.f32 %v140, %v232
  %v234 = vpop.f32.mrb[0].mxu0
  %235 = vmatprep.mubr.f32.mxu0 0.0
  %236 = vmatmul.mubr.f32.gmra.mrb[0].mxu0 %v154
  %v237 = vpop.f32.mrb[0].mxu0
  %v238 = vadd.f32 %v145, %v237
  %v239 = vpop.f32.mrb[0].mxu0
  %240 = vdwg.mxu0
  %vm241 = vcmask 1045504
  %v242 = vrot.slane %v14, 2
  %v243 = vrot.slane %v15, 2
  %v244 = vsel %vm241, %v242, %v243
  %v245 = vrot.slane %v16, 2
  %v246 = vsel %vm241, %v243, %v245
  %v247 = vrot.slane %v17, 2
  %v248 = vrot.slane %v18, 2
  %v249 = vsel %vm241, %v247, %v248
  %v250 = vrot.slane %v19, 2
  %v251 = vsel %vm241, %v248, %v250
  %s252 = scalar_lea.vmem %s1, 128
  %v253 = vld [vmem:[%s252] sm:$0xff]
  %v254 = vld [vmem:[%s252 + $0x8] sm:$0xff]
  %v255 = vld [vmem:[%s252 + $0x10] sm:$0xff]
  %v256 = vld [vmem:[%s252 + $0x18] sm:$0xff]
  %v257 = vld [vmem:[%s252 + $0x20] sm:$0xff]
  %v258 = vld [vmem:[%s252 + $0x28] sm:$0xff]
  %v259 = vld [vmem:[%s252 + $0x30] sm:$0xff]
  %v260 = vld [vmem:[%s252 + $0x38] sm:$0xff]
  %v261 = vsel %vm54, %v244, 0
  %v263 = vsel %vm54, %v246, 0
  %v265 = vsel %vm54, %v249, 0
  %v267 = vsel %vm54, %v251, 0
  %269 = vmatprep.subr.mxu0 0.0
  %270 = vmatpush1.msra.mxu0 %v253
  %271 = vmatprep.subr.mxu0 0.0
  %272 = vmatpush1.msra.mxu0 %v254
  %273 = vmatprep.subr.mxu0 0.0
  %274 = vmatpush1.msra.mxu0 %v255
  %275 = vmatprep.subr.mxu0 0.0
  %276 = vmatpush1.msra.mxu0 %v256
  %277 = vmatprep.subr.mxu0 0.0
  %278 = vmatpush1.msra.mxu0 %v257
  %279 = vmatprep.subr.mxu0 0.0
  %280 = vmatpush1.msra.mxu0 %v258
  %281 = vmatprep.subr.mxu0 0.0
  %282 = vmatpush1.msra.mxu0 %v259
  %283 = vmatprep.subr.mxu0 0.0
  %284 = vmatpush1.msra.mxu0 %v260
  %285 = vmatprep.subr.mxu0 0.0
  %286 = vmatpush1.msra.mxu0 0.0
  %287 = vmatprep.subr.mxu0 0.0
  %288 = vmatpush1.msra.mxu0 0.0
  %289 = vmatprep.subr.mxu0 0.0
  %290 = vmatpush1.msra.mxu0 0.0
  %291 = vmatprep.subr.mxu0 0.0
  %292 = vmatpush1.msra.mxu0 0.0
  %293 = vmatprep.subr.mxu0 0.0
  %294 = vmatpush1.msra.mxu0 0.0
  %295 = vmatprep.subr.mxu0 0.0
  %296 = vmatpush1.msra.mxu0 0.0
  %297 = vmatprep.subr.mxu0 0.0
  %298 = vmatpush1.msra.mxu0 0.0
  %299 = vmatprep.subr.mxu0 0.0
  %300 = vmatpush1.msra.mxu0 0.0
  %301 = vmatprep.subr.mxu0 0.0
  %302 = vmatpush1.msra.mxu0 0.0
  %303 = vmatprep.subr.mxu0 0.0
  %304 = vmatpush1.msra.mxu0 0.0
  %305 = vmatprep.subr.mxu0 0.0
  %306 = vmatpush1.msra.mxu0 0.0
  %307 = vmatprep.subr.mxu0 0.0
  %308 = vmatpush1.msra.mxu0 0.0
  %309 = vmatprep.subr.mxu0 0.0
  %310 = vmatpush1.msra.mxu0 0.0
  %311 = vmatprep.subr.mxu0 0.0
  %312 = vmatpush1.msra.mxu0 0.0
  %313 = vmatprep.subr.mxu0 0.0
  %314 = vmatpush1.msra.mxu0 0.0
  %315 = vmatprep.subr.mxu0 0.0
  %316 = vmatpush1.msra.mxu0 0.0
  %317 = vmatprep.subr.mxu0 0.0
  %318 = vmatpush1.msra.mxu0 0.0
  %319 = vmatprep.subr.mxu0 0.0
  %320 = vmatpush1.msra.mxu0 0.0
  %321 = vmatprep.subr.mxu0 0.0
  %322 = vmatpush1.msra.mxu0 0.0
  %323 = vmatprep.subr.mxu0 0.0
  %324 = vmatpush1.msra.mxu0 0.0
  %325 = vmatprep.subr.mxu0 0.0
  %326 = vmatpush1.msra.mxu0 0.0
  %327 = vmatprep.subr.mxu0 0.0
  %328 = vmatpush1.msra.mxu0 0.0
  %329 = vmatprep.subr.mxu0 0.0
  %330 = vmatpush1.msra.mxu0 0.0
  %331 = vmatprep.subr.mxu0 0.0
  %332 = vmatpush1.msra.mxu0 0.0
  %333 = vmatprep.mubr.f32.mxu0 0.0
  %334 = vmatmul.mubr.f32.gmra.mrb[0].mxu0 %v261
  %v335 = vpop.f32.mrb[0].mxu0
  %v336 = vadd.f32 0.0, %v335
  %v337 = vpop.f32.mrb[0].mxu0
  %338 = vmatprep.mubr.f32.mxu0 0.0
  %339 = vmatmul.mubr.f32.gmra.mrb[0].mxu0 %v263
  %v340 = vpop.f32.mrb[0].mxu0
  %v341 = vadd.f32 0.0, %v340
  %v342 = vpop.f32.mrb[0].mxu0
  %343 = vmatprep.mubr.f32.mxu0 0.0
  %344 = vmatmul.mubr.f32.gmra.mrb[0].mxu0 %v265
  %v345 = vpop.f32.mrb[0].mxu0
  %v346 = vadd.f32 0.0, %v345
  %v347 = vpop.f32.mrb[0].mxu0
  %348 = vmatprep.mubr.f32.mxu0 0.0
  %349 = vmatmul.mubr.f32.gmra.mrb[0].mxu0 %v267
  %v350 = vpop.f32.mrb[0].mxu0
  %v351 = vadd.f32 0.0, %v350
  %v352 = vpop.f32.mrb[0].mxu0
  %353 = vdwg.mxu0
  %v354 = vadd.f32 %v223, %v336
  %v355 = vadd.f32 %v228, %v341
  %v356 = vadd.f32 %v233, %v346
  %v357 = vadd.f32 %v238, %v351
  %v358 = vld [vmem:[%s2] sm:$0x1]
  %v360 = vlaneseq
  %v361 = vshrl.u32 %v360, 7
  %v362 = vsub.s32 0, %v361
  %v363 = vrot.slane %v358, %v362
  %v365 = vadd.f32 %v354, %v363
  %v366 = vadd.f32 %v355, %v363
  %v367 = vadd.f32 %v356, %v363
  %v368 = vadd.f32 %v357, %v363
  %369 = vst [vmem:[%s3] sm:$0xff] %v365
  %370 = vst [vmem:[%s3 + $0x8] sm:$0xff] %v366
  %371 = vst [vmem:[%s3 + $0x10] sm:$0xff] %v367
  %372 = vst [vmem:[%s3 + $0x18] sm:$0xff] %v368
  // Predicated region
  $region14: #{unet_forward.1} parent=0 // pred_check
    _
  $region15: #{unet_forward.1} parent=0 // pred_check_branch
    %374 = sbr.rel (0) target = $region17
  $region16: #{unet_forward.1} parent=0 // pred_region
    _
  $region17: #{unet_forward.1} parent=0 // pred_fallthru
    _
  // Predicated region
  $region18: #{unet_forward.1} parent=0 // pred_check
    _
  $region19: #{unet_forward.1} parent=0 // pred_check_branch
    %376 = sbr.rel (0) target = $region21
  $region20: #{unet_forward.1} parent=0 // pred_region
    _
  $region21: #{unet_forward.1} parent=0 // pred_fallthru
    _

</llo_original>
